<compile_context>
chip_gen: v6e
topology: v6e:2x2x1
jax: 0.10.0
libtpu: 0.0.40
codegen_flags: <defaults>
</compile_context>

<pallas_src>
import functools

import jax
import jax.numpy as jnp
from jax import lax
from jax.experimental import pallas as pl
from jax.experimental.pallas import tpu as pltpu


def _ls_ce_kernel(logits_ref, labels_ref, loss_ref, valid_ref,
                  m_sc, s_sc, sumx_sc, tgt_sc,
                  *, ignore_index, ls, inv_c, tile_c):
    """Row-tile x class-tile step of label-smoothed CE.

    Scratch (per row, persisted across the class axis):
      m_sc    running max of logits
      s_sc    running sum(exp(logit - m))
      sumx_sc running sum(logits)
      tgt_sc  logit at the target class (picked up when its tile streams by)
    """
    j = pl.program_id(1)

    x = logits_ref[...].astype(jnp.float32)            # (TILE_N, TILE_C) f32
    labels = labels_ref[...]                            # (TILE_N, 1) int32
    tn, tc = x.shape

    @pl.when(j == 0)
    def _():
        m_sc[...] = jnp.full_like(m_sc, -jnp.inf)
        s_sc[...] = jnp.zeros_like(s_sc)
        sumx_sc[...] = jnp.zeros_like(sumx_sc)
        tgt_sc[...] = jnp.zeros_like(tgt_sc)

    # global class indices covered by this tile
    col = lax.broadcasted_iota(jnp.int32, (tn, tc), 1) + j * tile_c

    # online logsumexp update
    m_old = m_sc[...]
    m_new = jnp.maximum(m_old, jnp.max(x, axis=-1, keepdims=True))
    s_sc[...] = (s_sc[...] * jnp.exp(m_old - m_new)
                 + jnp.sum(jnp.exp(x - m_new), axis=-1, keepdims=True))
    m_sc[...] = m_new

    # running sum of logits (for the uniform/smoothing term) and target logit
    # (compare + select + reduce stays on the VPU; no MXU, no materialized onehot)
    sumx_sc[...] = sumx_sc[...] + jnp.sum(x, axis=-1, keepdims=True)
    tgt_sc[...] = tgt_sc[...] + jnp.sum(
        jnp.where(col == labels, x, 0.0), axis=-1, keepdims=True)

    @pl.when(j == pl.num_programs(1) - 1)
    def _():
        lse = m_sc[...] + jnp.log(s_sc[...])             # (TILE_N, 1)
        nll_target = lse - tgt_sc[...]
        nll_uniform = lse - sumx_sc[...] * inv_c          # 1/C folded at trace time
        loss_i = (1.0 - ls) * nll_target + ls * nll_uniform
        valid = labels != ignore_index
        # select (not multiply): NaN/inf in ignored rows cannot leak into the sum
        loss_ref[...] = jnp.where(valid, loss_i, 0.0)
        valid_ref[...] = valid.astype(jnp.float32)


def _round_up(x, m):
    return ((x + m - 1) // m) * m


def _choose_tiles(n, c, itemsize):
    # Class tile: full C when it is small or not lane-aligned, otherwise the
    # largest 128-multiple divisor <= 2048 (streaming logsumexp handles the rest).
    if c <= 2048 or c % 128 != 0:
        tile_c = c
    else:
        tile_c = c
        for t in (2048, 1024, 512, 256, 128):
            if c % t == 0:
                tile_c = t
                break

    # Row tile: multiple of the sublane pack (8 for f32, 16 for bf16/fp16), at
    # most 256, and sized so a single logits block stays <= ~2 MiB — keeps the
    # double-buffered pipeline comfortably inside v7x's 64 MiB VMEM while still
    # being large enough to amortize per-grid-step overhead on v5e/v6e.
    min_tile = 16 if itemsize < 4 else 8
    budget = 2 * 1024 * 1024
    desired = min(256, _round_up(n, min_tile))
    tile_n = min_tile
    for t in (256, 128, 64, 32, 16, 8):
        if t < min_tile or t > desired:
            continue
        if t * tile_c * itemsize <= budget:
            tile_n = t
            break
    return tile_n, tile_c


def label_smoothing_ce(logits, labels, *, ignore_index=-1, ls=0.1,
                       tile_n=None, tile_c=None):
    """logits: (N, C) float, labels: (N,) int. Returns scalar f32 mean loss."""
    n, c = logits.shape
    itemsize = jnp.dtype(logits.dtype).itemsize
    auto_tn, auto_tc = _choose_tiles(n, c, itemsize)
    tile_n = auto_tn if tile_n is None else tile_n
    tile_c = auto_tc if tile_c is None else tile_c
    assert tile_n % 8 == 0, "row tile must be a multiple of 8"
    assert tile_c == c or (c % tile_c == 0 and tile_c % 128 == 0), \
        "class tile must be the full class dim or a 128-multiple divisor"

    labels2d = labels.reshape(n, 1).astype(jnp.int32)

    # pad rows to a multiple of tile_n; padded rows get ignore_index labels and
    # finite (zero) logits, so they contribute nothing to loss or count.
    n_pad = _round_up(n, tile_n)
    if n_pad != n:
        logits = jnp.pad(logits, ((0, n_pad - n), (0, 0)))
        labels2d = jnp.pad(labels2d, ((0, n_pad - n), (0, 0)),
                           constant_values=ignore_index)

    grid = (n_pad // tile_n, c // tile_c)

    kernel = functools.partial(
        _ls_ce_kernel,
        ignore_index=int(ignore_index),
        ls=float(ls),
        inv_c=1.0 / float(c),
        tile_c=int(tile_c),
    )

    loss_rows, valid_rows = pl.pallas_call(
        kernel,
        out_shape=(jax.ShapeDtypeStruct((n_pad, 1), jnp.float32),
                   jax.ShapeDtypeStruct((n_pad, 1), jnp.float32)),
        grid_spec=pltpu.PrefetchScalarGridSpec(
            num_scalar_prefetch=0,
            grid=grid,
            in_specs=[
                pl.BlockSpec((tile_n, tile_c), lambda i, j: (i, j)),
                pl.BlockSpec((tile_n, 1), lambda i, j: (i, 0)),
            ],
            out_specs=[
                pl.BlockSpec((tile_n, 1), lambda i, j: (i, 0)),
                pl.BlockSpec((tile_n, 1), lambda i, j: (i, 0)),
            ],
            scratch_shapes=[pltpu.VMEM((tile_n, 1), jnp.float32)] * 4,
        ),
        compiler_params=pltpu.CompilerParams(
            dimension_semantics=("parallel", "arbitrary"),
            vmem_limit_bytes=32 * 1024 * 1024,
        ),
    )(logits, labels2d)

    total = jnp.sum(loss_rows, dtype=jnp.float32)
    count = jnp.sum(valid_rows, dtype=jnp.float32)
    # count == 0 (every label ignored) yields NaN, matching PyTorch on an
    # empty selection.
    return total / count


def _reference(logits, labels, *, ignore_index=-1, ls=0.1):
    mask = labels != ignore_index
    x = logits[mask].astype(jnp.float32)
    y = labels[mask]
    logp = jax.nn.log_softmax(x, axis=-1)
    nll_t = -jnp.take_along_axis(logp, y[:, None], axis=-1)[:, 0]
    nll_u = -jnp.mean(logp, axis=-1)
    return jnp.mean((1.0 - ls) * nll_t + ls * nll_u)


if __name__ == "__main__":
    key = jax.random.PRNGKey(0)

    # --- test 1: small shape, single tile (N=8, C=32) ---
    k1, k2, k3, key = jax.random.split(key, 4)
    N, C = 8, 32
    logits = jax.random.normal(k1, (N, C), dtype=jnp.float32)
    labels = jax.random.randint(k2, (N,), 0, C, dtype=jnp.int32)
    labels = jnp.where(jax.random.bernoulli(k3, 0.25, (N,)), -1, labels)

    loss = jax.block_until_ready(label_smoothing_ce(logits, labels))
    ref = jax.block_until_ready(_reference(logits, labels))
    assert jnp.allclose(loss, ref, atol=2e-5, rtol=2e-5), (loss, ref)

    # --- test 2: force the tiled/streaming path (2 row tiles x 2 class tiles) ---
    k1, k2, k3, key = jax.random.split(key, 4)
    N2, C2 = 16, 256
    logits2 = jax.random.normal(k1, (N2, C2), dtype=jnp.float32)
    labels2 = jax.random.randint(k2, (N2,), 0, C2, dtype=jnp.int32)
    labels2 = jnp.where(jax.random.bernoulli(k3, 0.25, (N2,)), -1, labels2)

    loss2 = jax.block_until_ready(
        label_smoothing_ce(logits2, labels2, tile_n=8, tile_c=128))
    ref2 = jax.block_until_ready(_reference(logits2, labels2))
    assert jnp.allclose(loss2, ref2, atol=2e-5, rtol=2e-5), (loss2, ref2)

    print("KERNEL_OK")
</pallas_src>

<mosaic_0001>
module attributes {stable_mosaic.version = 11 : i64} {
  func.func @_ls_ce_kernel(%arg0: i32, %arg1: i32, %arg2: memref<8x32xf32, #tpu.memory_space<vmem>>, %arg3: memref<8x1xi32, #tpu.memory_space<vmem>>, %arg4: memref<8x1xf32, #tpu.memory_space<vmem>>, %arg5: memref<8x1xf32, #tpu.memory_space<vmem>>, %arg6: memref<8x1xf32, #tpu.memory_space<vmem>>, %arg7: memref<8x1xf32, #tpu.memory_space<vmem>>, %arg8: memref<8x1xf32, #tpu.memory_space<vmem>>, %arg9: memref<8x1xf32, #tpu.memory_space<vmem>>) attributes {dimension_semantics = [#tpu.dimension_semantics<parallel>, #tpu.dimension_semantics<arbitrary>], iteration_bounds = array<i64: 1, 1>, scalar_prefetch = 0 : i64, scratch_operands = 4 : i64, tpu.core_type = #tpu.core_type<tc>, window_params = [{transform_indices = @transform_0, window_bounds = array<i64: 8, 32>}, {transform_indices = @transform_1, window_bounds = array<i64: 8, 1>}, {transform_indices = @transform_2, window_bounds = array<i64: 8, 1>}, {transform_indices = @transform_3, window_bounds = array<i64: 8, 1>}]} {
    %c0 = arith.constant 0 : index
    %c0_0 = arith.constant 0 : index
    %0 = vector.load %arg2[%c0, %c0_0] : memref<8x32xf32, #tpu.memory_space<vmem>>, vector<8x32xf32>
    %c0_1 = arith.constant 0 : index
    %c0_2 = arith.constant 0 : index
    %1 = vector.load %arg3[%c0_1, %c0_2] : memref<8x1xi32, #tpu.memory_space<vmem>>, vector<8x1xi32>
    %c0_i32 = arith.constant 0 : i32
    %2 = arith.cmpi eq, %arg1, %c0_i32 : i32
    %3 = arith.extui %2 : i1 to i32
    %c0_i32_3 = arith.constant 0 : i32
    %4 = arith.cmpi ne, %3, %c0_i32_3 : i32
    scf.if %4 {
      %cst_26 = arith.constant 0xFF800000 : f32
      %42 = vector.broadcast %cst_26 : f32 to vector<8x1xf32>
      %c0_27 = arith.constant 0 : index
      %c0_28 = arith.constant 0 : index
      %43 = vector.load %arg6[%c0_27, %c0_28] : memref<8x1xf32, #tpu.memory_space<vmem>>, vector<8x1xf32>
      tpu.vector_store %arg6[%c0_27, %c0_28], %42 {strides = array<i32>} : memref<8x1xf32, #tpu.memory_space<vmem>>, vector<8x1xf32>,
      %cst_29 = arith.constant 0.000000e+00 : f32
      %44 = vector.broadcast %cst_29 : f32 to vector<8x1xf32>
      %c0_30 = arith.constant 0 : index
      %c0_31 = arith.constant 0 : index
      %45 = vector.load %arg7[%c0_30, %c0_31] : memref<8x1xf32, #tpu.memory_space<vmem>>, vector<8x1xf32>
      tpu.vector_store %arg7[%c0_30, %c0_31], %44 {strides = array<i32>} : memref<8x1xf32, #tpu.memory_space<vmem>>, vector<8x1xf32>,
      %cst_32 = arith.constant 0.000000e+00 : f32
      %46 = vector.broadcast %cst_32 : f32 to vector<8x1xf32>
      %c0_33 = arith.constant 0 : index
      %c0_34 = arith.constant 0 : index
      %47 = vector.load %arg8[%c0_33, %c0_34] : memref<8x1xf32, #tpu.memory_space<vmem>>, vector<8x1xf32>
      tpu.vector_store %arg8[%c0_33, %c0_34], %46 {strides = array<i32>} : memref<8x1xf32, #tpu.memory_space<vmem>>, vector<8x1xf32>,
      %cst_35 = arith.constant 0.000000e+00 : f32
      %48 = vector.broadcast %cst_35 : f32 to vector<8x1xf32>
      %c0_36 = arith.constant 0 : index
      %c0_37 = arith.constant 0 : index
      %49 = vector.load %arg9[%c0_36, %c0_37] : memref<8x1xf32, #tpu.memory_space<vmem>>, vector<8x1xf32>
      tpu.vector_store %arg9[%c0_36, %c0_37], %48 {strides = array<i32>} : memref<8x1xf32, #tpu.memory_space<vmem>>, vector<8x1xf32>,
    } else {
    }
    %5 = tpu.iota {dimensions = array<i32: 1>} : vector<8x32xi32>
    %c32_i32 = arith.constant 32 : i32
    %6 = arith.muli %arg1, %c32_i32 : i32
    %7 = vector.broadcast %6 : i32 to vector<8x32xi32>
    %8 = arith.addi %5, %7 : vector<8x32xi32>
    %c0_4 = arith.constant 0 : index
    %c0_5 = arith.constant 0 : index
    %9 = vector.load %arg6[%c0_4, %c0_5] : memref<8x1xf32, #tpu.memory_space<vmem>>, vector<8x1xf32>
    %cst = arith.constant dense<0xFF800000> : vector<8xf32>
    %10 = vector.multi_reduction <maximumf>, %0, %cst [1] : vector<8x32xf32> to vector<8xf32>
    %11 = vector.shape_cast %10 : vector<8xf32> to vector<8x1xf32>
    %12 = arith.maximumf %9, %11 : vector<8x1xf32>
    %c0_6 = arith.constant 0 : index
    %c0_7 = arith.constant 0 : index
    %13 = vector.load %arg7[%c0_6, %c0_7] : memref<8x1xf32, #tpu.memory_space<vmem>>, vector<8x1xf32>
    %14 = arith.subf %9, %12 : vector<8x1xf32>
    %15 = math.exp %14 : vector<8x1xf32>
    %16 = arith.mulf %13, %15 : vector<8x1xf32>
    %17 = vector.broadcast %12 : vector<8x1xf32> to vector<8x32xf32>
    %18 = arith.subf %0, %17 : vector<8x32xf32>
    %19 = math.exp %18 : vector<8x32xf32>
    %cst_8 = arith.constant dense<0.000000e+00> : vector<8xf32>
    %20 = vector.multi_reduction <add>, %19, %cst_8 [1] : vector<8x32xf32> to vector<8xf32>
    %21 = vector.shape_cast %20 : vector<8xf32> to vector<8x1xf32>
    %22 = arith.addf %16, %21 : vector<8x1xf32>
    %c0_9 = arith.constant 0 : index
    %c0_10 = arith.constant 0 : index
    %23 = vector.load %arg7[%c0_9, %c0_10] : memref<8x1xf32, #tpu.memory_space<vmem>>, vector<8x1xf32>
    tpu.vector_store %arg7[%c0_9, %c0_10], %22 {strides = array<i32>} : memref<8x1xf32, #tpu.memory_space<vmem>>, vector<8x1xf32>,
    %c0_11 = arith.constant 0 : index
    %c0_12 = arith.constant 0 : index
    %24 = vector.load %arg6[%c0_11, %c0_12] : memref<8x1xf32, #tpu.memory_space<vmem>>, vector<8x1xf32>
    tpu.vector_store %arg6[%c0_11, %c0_12], %12 {strides = array<i32>} : memref<8x1xf32, #tpu.memory_space<vmem>>, vector<8x1xf32>,
    %c0_13 = arith.constant 0 : index
    %c0_14 = arith.constant 0 : index
    %25 = vector.load %arg8[%c0_13, %c0_14] : memref<8x1xf32, #tpu.memory_space<vmem>>, vector<8x1xf32>
    %cst_15 = arith.constant dense<0.000000e+00> : vector<8xf32>
    %26 = vector.multi_reduction <add>, %0, %cst_15 [1] : vector<8x32xf32> to vector<8xf32>
    %27 = vector.shape_cast %26 : vector<8xf32> to vector<8x1xf32>
    %28 = arith.addf %25, %27 : vector<8x1xf32>
    %c0_16 = arith.constant 0 : index
    %c0_17 = arith.constant 0 : index
    %29 = vector.load %arg8[%c0_16, %c0_17] : memref<8x1xf32, #tpu.memory_space<vmem>>, vector<8x1xf32>
    tpu.vector_store %arg8[%c0_16, %c0_17], %28 {strides = array<i32>} : memref<8x1xf32, #tpu.memory_space<vmem>>, vector<8x1xf32>,
    %c0_18 = arith.constant 0 : index
    %c0_19 = arith.constant 0 : index
    %30 = vector.load %arg9[%c0_18, %c0_19] : memref<8x1xf32, #tpu.memory_space<vmem>>, vector<8x1xf32>
    %31 = vector.broadcast %1 : vector<8x1xi32> to vector<8x32xi32>
    %32 = arith.cmpi eq, %8, %31 : vector<8x32xi32>
    %cst_20 = arith.constant 0.000000e+00 : f32
    %33 = vector.broadcast %cst_20 : f32 to vector<8x32xf32>
    %34 = arith.select %32, %0, %33 : vector<8x32xi1>, vector<8x32xf32>
    %cst_21 = arith.constant dense<0.000000e+00> : vector<8xf32>
    %35 = vector.multi_reduction <add>, %34, %cst_21 [1] : vector<8x32xf32> to vector<8xf32>
    %36 = vector.shape_cast %35 : vector<8xf32> to vector<8x1xf32>
    %37 = arith.addf %30, %36 : vector<8x1xf32>
    %c0_22 = arith.constant 0 : index
    %c0_23 = arith.constant 0 : index
    %38 = vector.load %arg9[%c0_22, %c0_23] : memref<8x1xf32, #tpu.memory_space<vmem>>, vector<8x1xf32>
    tpu.vector_store %arg9[%c0_22, %c0_23], %37 {strides = array<i32>} : memref<8x1xf32, #tpu.memory_space<vmem>>, vector<8x1xf32>,
    %c0_i32_24 = arith.constant 0 : i32
    %39 = arith.cmpi eq, %arg1, %c0_i32_24 : i32
    %40 = arith.extui %39 : i1 to i32
    %c0_i32_25 = arith.constant 0 : i32
    %41 = arith.cmpi ne, %40, %c0_i32_25 : i32
    scf.if %41 {
      %c0_26 = arith.constant 0 : index
      %c0_27 = arith.constant 0 : index
      %42 = vector.load %arg6[%c0_26, %c0_27] : memref<8x1xf32, #tpu.memory_space<vmem>>, vector<8x1xf32>
      %c0_28 = arith.constant 0 : index
      %c0_29 = arith.constant 0 : index
      %43 = vector.load %arg7[%c0_28, %c0_29] : memref<8x1xf32, #tpu.memory_space<vmem>>, vector<8x1xf32>
      %44 = math.log %43 : vector<8x1xf32>
      %45 = arith.addf %42, %44 : vector<8x1xf32>
      %c0_30 = arith.constant 0 : index
      %c0_31 = arith.constant 0 : index
      %46 = vector.load %arg9[%c0_30, %c0_31] : memref<8x1xf32, #tpu.memory_space<vmem>>, vector<8x1xf32>
      %47 = arith.subf %45, %46 : vector<8x1xf32>
      %c0_32 = arith.constant 0 : index
      %c0_33 = arith.constant 0 : index
      %48 = vector.load %arg8[%c0_32, %c0_33] : memref<8x1xf32, #tpu.memory_space<vmem>>, vector<8x1xf32>
      %cst_34 = arith.constant 3.125000e-02 : f32
      %49 = vector.broadcast %cst_34 : f32 to vector<8x1xf32>
      %50 = arith.mulf %48, %49 : vector<8x1xf32>
      %51 = arith.subf %45, %50 : vector<8x1xf32>
      %cst_35 = arith.constant 0.899999976 : f32
      %52 = vector.broadcast %cst_35 : f32 to vector<8x1xf32>
      %53 = arith.mulf %52, %47 : vector<8x1xf32>
      %cst_36 = arith.constant 1.000000e-01 : f32
      %54 = vector.broadcast %cst_36 : f32 to vector<8x1xf32>
      %55 = arith.mulf %54, %51 : vector<8x1xf32>
      %56 = arith.addf %53, %55 : vector<8x1xf32>
      %c-1_i32 = arith.constant -1 : i32
      %57 = vector.broadcast %c-1_i32 : i32 to vector<8x1xi32>
      %58 = arith.cmpi ne, %1, %57 : vector<8x1xi32>
      %cst_37 = arith.constant 0.000000e+00 : f32
      %59 = vector.broadcast %cst_37 : f32 to vector<8x1xf32>
      %60 = arith.select %58, %56, %59 : vector<8x1xi1>, vector<8x1xf32>
      %c0_38 = arith.constant 0 : index
      %c0_39 = arith.constant 0 : index
      %61 = vector.load %arg4[%c0_38, %c0_39] : memref<8x1xf32, #tpu.memory_space<vmem>>, vector<8x1xf32>
      tpu.vector_store %arg4[%c0_38, %c0_39], %60 {strides = array<i32>} : memref<8x1xf32, #tpu.memory_space<vmem>>, vector<8x1xf32>,
      %62 = arith.extui %58 : vector<8x1xi1> to vector<8x1xi32>
      %63 = arith.sitofp %62 : vector<8x1xi32> to vector<8x1xf32>
      %c0_40 = arith.constant 0 : index
      %c0_41 = arith.constant 0 : index
      %64 = vector.load %arg5[%c0_40, %c0_41] : memref<8x1xf32, #tpu.memory_space<vmem>>, vector<8x1xf32>
      tpu.vector_store %arg5[%c0_40, %c0_41], %63 {strides = array<i32>} : memref<8x1xf32, #tpu.memory_space<vmem>>, vector<8x1xf32>,
    } else {
    }
    return
  }
  func.func @transform_0(%arg0: i32, %arg1: i32) -> (i32, i32) {
    %c0_i32 = arith.constant 0 : i32
    return %arg0, %arg1 : i32, i32
  }
  func.func @transform_1(%arg0: i32, %arg1: i32) -> (i32, i32) {
    %c0_i32 = arith.constant 0 : i32
    %c0_i32_0 = arith.constant 0 : i32
    return %arg0, %c0_i32 : i32, i32
  }
  func.func @transform_2(%arg0: i32, %arg1: i32) -> (i32, i32) {
    %c0_i32 = arith.constant 0 : i32
    %c0_i32_0 = arith.constant 0 : i32
    return %arg0, %c0_i32 : i32, i32
  }
  func.func @transform_3(%arg0: i32, %arg1: i32) -> (i32, i32) {
    %c0_i32 = arith.constant 0 : i32
    %c0_i32_0 = arith.constant 0 : i32
    return %arg0, %c0_i32 : i32, i32
  }
}

</mosaic_0001>

<llo_original>
// kernel: tpu_custom_call.1
$region0: #{tpu_custom_call.1}
  #allocation0 [shape = 'u32[]', space=smem, size = 0x4, offset = 0x4, fixed_abs, tag = 'smem constant byte address 0x4 - core index']
  #allocation1 [shape = 'u32[144,128]{1,0:T(1,128)}', space=vmem, size = 0x12000, scoped, tag = 'internal scratch']
  #allocation2 [shape = 'f32[8,1]{1,0:T(8,128)}', space=vmem, size = 0x1000, scoped, tag = 'scratch operand']
  #allocation3 [shape = 'f32[8,1]{1,0:T(8,128)}', space=vmem, size = 0x1000, scoped, tag = 'scratch operand']
  #allocation4 [shape = 'f32[8,1]{1,0:T(8,128)}', space=vmem, size = 0x1000, scoped, tag = 'scratch operand']
  #allocation5 [shape = 'f32[8,1]{1,0:T(8,128)}', space=vmem, size = 0x1000, scoped, tag = 'scratch operand']
  %s0 = inlined_call_operand.vmem [shape: f32[8,32], index: 0, kind: input, shape index: {}]
  %s1 = inlined_call_operand.vmem [shape: s32[8,1], index: 1, kind: input, shape index: {}]
  %s2 = inlined_call_operand.vmem [shape: f32[8,1], index: 2, kind: output, shape index: {0}]
  %s3 = inlined_call_operand.vmem [shape: f32[8,1], index: 3, kind: output, shape index: {1}]
  %4 = xla_tuple %s2, %s3
  %s5 = sld [smem:[#allocation0]]
  $region34: #{tpu_custom_call.1} parent=0
    _
  %s7 = ssub.s32 1, %s5
  %s8 = scalar_select 0, %s7, %s5
  // Predicated region
  $region2: #{tpu_custom_call.1} parent=0 // pred_check
    _
  $region3: #{tpu_custom_call.1} parent=0 // pred_check_branch
    %10 = sbr.rel (0) target = $region5
  $region4: #{tpu_custom_call.1} parent=0 // pred_region
    _
  $region5: #{tpu_custom_call.1} parent=0 // pred_fallthru
    _
  // Predicated region
  $region6: #{tpu_custom_call.1} parent=0 // pred_check
    _
  $region7: #{tpu_custom_call.1} parent=0 // pred_check_branch
    %12 = sbr.rel (0) target = $region9
  $region8: #{tpu_custom_call.1} parent=0 // pred_region
    _
  $region9: #{tpu_custom_call.1} parent=0 // pred_fallthru
    _
  %v13 = vld [vmem:[%s0] sm:$0xff]
  %v14 = vld [vmem:[%s1] sm:$0xff]
  %p15 = scmp.eq.s32.totalorder 0, 0
  // Predicated region
  $region10: #{tpu_custom_call.1} parent=0 // pred_check
    %p16 = pneg %p15
  $region11: #{tpu_custom_call.1} parent=0 // pred_check_branch
    %18 = sbr.rel (%p16) target = $region13
  $region12: #{tpu_custom_call.1} parent=0 // pred_region
    %vm19 = vcmask 7168
    %20 = vst.msk [vmem:[#allocation2] sm:$0xff] %vm19, -inf
    %21 = vst.msk [vmem:[#allocation3] sm:$0xff] %vm19, 0.0
    %22 = vst.msk [vmem:[#allocation4] sm:$0xff] %vm19, 0.0
    %23 = vst.msk [vmem:[#allocation5] sm:$0xff] %vm19, 0.0
  $region13: #{tpu_custom_call.1} parent=0 // pred_fallthru
    _
  %v24 = vlaneseq
  %v25 = vand.u32 %v24, 127
  %s26 = smul.u32 0, 32
  %v27 = vstv %s26
  %v28 = vadd.s32 %v25, %v27
  %v29 = vld [vmem:[#allocation2] sm:$0xff]
  %vm30 = vcmask 261120
  %v31 = vsel %vm30, %v13, -inf
  %32 = vmax.xlane.f32.xlu0 %v31
  %v33 = vpop.xlane.xlu0 %32
  %v34 = vmax.f32 %v29, %v33
  %v35 = vld [vmem:[#allocation3] sm:$0xff]
  %v36 = vsub.f32 %v29, %v34
  %v37 = vmul.f32 %v36, 1.442695
  %v38 = vpow.pop %v37
  %v39 = vmul.f32 %v35, %v38
  %41 = vset.pattern.permute.xlu0 0
  %42 = vperm.xlu0 %41, %v34
  %v43 = vpop.permute.xlu0 %42
  %v45 = vsub.f32 %v13, %v43
  %v46 = vmul.f32 %v45, 1.442695
  %v47 = vpow.pop %v46
  %v48 = vsel %vm30, %v47, 0.0
  %49 = vadd.xlane.f32.xlu0 %v48
  %v50 = vpop.xlane.xlu0 %49
  %v51 = vadd.f32 %v39, %v50
  %vm52 = vcmask 7168
  %53 = vst.msk [vmem:[#allocation3] sm:$0xff] %vm52, %v51
  %54 = vst.msk [vmem:[#allocation2] sm:$0xff] %vm52, %v34
  %v55 = vld [vmem:[#allocation4] sm:$0xff]
  %v56 = vsel %vm30, %v13, 0.0
  %57 = vadd.xlane.f32.xlu0 %v56
  %v58 = vpop.xlane.xlu0 %57
  %v59 = vadd.f32 %v55, %v58
  %60 = vst.msk [vmem:[#allocation4] sm:$0xff] %vm52, %v59
  %v61 = vld [vmem:[#allocation5] sm:$0xff]
  %62 = vset.pattern.permute.xlu0 0
  %63 = vperm.xlu0 %62, %v14
  %v64 = vpop.permute.xlu0 %63
  %vm65 = vcmp.eq.s32.totalorder %v28, %v64
  %v66 = vsel %vm65, %v13, 0.0
  %v67 = vsel %vm30, %v66, 0.0
  %68 = vadd.xlane.f32.xlu0 %v67
  %v69 = vpop.xlane.xlu0 %68
  %v70 = vadd.f32 %v61, %v69
  %71 = vst.msk [vmem:[#allocation5] sm:$0xff] %vm52, %v70
  // Predicated region
  $region14: #{tpu_custom_call.1} parent=0 // pred_check
    %p72 = pneg %p15
  $region15: #{tpu_custom_call.1} parent=0 // pred_check_branch
    %74 = sbr.rel (%p72) target = $region17
  $region16: #{tpu_custom_call.1} parent=0 // pred_region
    %v75 = vld [vmem:[#allocation2] sm:$0xff]
    %v76 = vld [vmem:[#allocation3] sm:$0xff]
    %v77 = vlog2.pop %v76
    %v78 = vmul.f32 %v77, 0.6931472
    %v79 = vadd.f32 %v75, %v78
    %v80 = vld [vmem:[#allocation5] sm:$0xff]
    %v81 = vsub.f32 %v79, %v80
    %v82 = vld [vmem:[#allocation4] sm:$0xff]
    %v83 = vmul.f32 %v82, 0.03125
    %v84 = vsub.f32 %v79, %v83
    %v85 = vmul.f32 %v81, 0.9
    %v86 = vmul.f32 %v84, 0.1
    %v87 = vadd.f32 %v85, %v86
    %vm88 = vcmp.ne.s32.totalorder %v14, 4294967295
    %v89 = vsel %vm88, %v87, 0.0
    %90 = vst.msk [vmem:[%s2] sm:$0xff] %vm52, %v89
    %v91 = vsel %vm88, 1, 0
    %v92 = vcvt.s32.f32 %v91
    %93 = vst.msk [vmem:[%s3] sm:$0xff] %vm52, %v92
  $region17: #{tpu_custom_call.1} parent=0 // pred_fallthru
    _
  // Predicated region
  $region18: #{tpu_custom_call.1} parent=0 // pred_check
    _
  $region19: #{tpu_custom_call.1} parent=0 // pred_check_branch
    %95 = sbr.rel (0) target = $region21
  $region20: #{tpu_custom_call.1} parent=0 // pred_region
    _
  $region21: #{tpu_custom_call.1} parent=0 // pred_fallthru
    _
  // Predicated region
  $region22: #{tpu_custom_call.1} parent=0 // pred_check
    _
  $region23: #{tpu_custom_call.1} parent=0 // pred_check_branch
    %97 = sbr.rel (0) target = $region25
  $region24: #{tpu_custom_call.1} parent=0 // pred_region
    _
  $region25: #{tpu_custom_call.1} parent=0 // pred_fallthru
    _
  // Predicated region
  $region26: #{tpu_custom_call.1} parent=0 // pred_check
    _
  $region27: #{tpu_custom_call.1} parent=0 // pred_check_branch
    %99 = sbr.rel (0) target = $region29
  $region28: #{tpu_custom_call.1} parent=0 // pred_region
    _
  $region29: #{tpu_custom_call.1} parent=0 // pred_fallthru
    _
  // Predicated region
  $region30: #{tpu_custom_call.1} parent=0 // pred_check
    _
  $region31: #{tpu_custom_call.1} parent=0 // pred_check_branch
    %101 = sbr.rel (0) target = $region33
  $region32: #{tpu_custom_call.1} parent=0 // pred_region
    _
  $region33: #{tpu_custom_call.1} parent=0 // pred_fallthru
    _

</llo_original>
